<compile_context>
chip_gen: v7x
topology: tpu7x:2x2x1
jax: 0.10.0
libtpu: 0.0.40
codegen_flags: <defaults>
</compile_context>

<pallas_src>
from collections import Counter

import numpy as np
import jax
import jax.numpy as jnp
from jax.experimental import pallas as pl
from jax.experimental.pallas import tpu as pltpu


def _round_up(x, m):
    return (x + m - 1) // m * m


# ---------------------------------------------------------------------------
# Pallas kernel 1: fused encoder projection (repr head || classifier head)
# ---------------------------------------------------------------------------
def _encoder_kernel(x_ref, w_ref, b_ref, out_ref):
    # x: (TM, C) f32; w: (C, P) bf16 (resident); b: (1, P) f32; out: (TM, P) bf16
    x = x_ref[...].astype(jnp.bfloat16)          # in-kernel cast; VPU has slack (store-bound)
    acc = jnp.dot(x, w_ref[...], preferred_element_type=jnp.float32) + b_ref[...]
    out_ref[...] = acc.astype(out_ref.dtype)     # narrow bf16 store: D+K columns, no zero padding


@jax.jit
def _encoder_launch(x_rows, w_fused, b_fused):
    M, C = x_rows.shape
    P = w_fused.shape[1]
    M8 = _round_up(M, 8)
    TM = min(2048, M8)                           # big tiles amortize per-step pipeline overhead
    if M8 >= 16:                                 # give the v7x dual-TC >=2 parallel grid steps
        TM = min(TM, _round_up((M8 + 1) // 2, 8))
    M_pad = _round_up(M, TM)                     # grid divides exactly
    if M_pad != M:
        x_rows = jnp.pad(x_rows, ((0, M_pad - M), (0, 0)))
    out = pl.pallas_call(
        _encoder_kernel,
        grid=(M_pad // TM,),
        in_specs=[
            pl.BlockSpec((TM, C), lambda i: (i, 0)),
            pl.BlockSpec((C, P), lambda i: (0, 0)),   # fused weight, resident
            pl.BlockSpec((1, P), lambda i: (0, 0)),   # fused bias, resident
        ],
        out_specs=pl.BlockSpec((TM, P), lambda i: (i, 0)),
        out_shape=jax.ShapeDtypeStruct((M_pad, P), jnp.bfloat16),
        compiler_params=pltpu.CompilerParams(dimension_semantics=("parallel",)),
    )(x_rows, w_fused, b_fused)
    return out[:M]


def encoder_apply(x_nlc, w_fused, b_fused, d_repr, n_classes):
    """Synthetic model: x (B, L, C) channels-last -> (repr (B, L, D) bf16, class (B, L, K) bf16)."""
    B, L, C = x_nlc.shape
    rows = _encoder_launch(x_nlc.reshape(B * L, C), w_fused, b_fused)
    out = rows[:, :d_repr].reshape(B, L, d_repr)
    cls = rows[:, d_repr:d_repr + n_classes].reshape(B, L, n_classes)
    return out, cls


# ---------------------------------------------------------------------------
# Pallas kernel 2: contrastive-loss core (shared by all three losses)
# ---------------------------------------------------------------------------
def _contrastive_core_kernel(z_ref, mask_ref, bias_ref, invden_ref, out_ref):
    # z: (TG, Nc, Dp) bf16; mask/bias: (Nr, Nc) f32; invden: (1, Nr) f32; out: (TG, Nr) f32
    nr = bias_ref.shape[0]
    z = z_ref[...]
    zl = z[:, :nr, :]                                        # anchors only (8-aligned row slice)
    sim = jnp.einsum('gnd,gmd->gnm', zl, z,
                     preferred_element_type=jnp.float32)      # (TG, Nr, Nc) f32 on the MXU
    sim = sim + bias_ref[...][None, :, :]                     # -1e9 on diag + padded candidates
    m = jnp.max(sim, axis=-1, keepdims=True)
    lse = jnp.log(jnp.sum(jnp.exp(sim - m), axis=-1)) + m[..., 0]        # (TG, Nr)
    # sum_j mask*(lse - sim)/den == lse - (sum_j mask*sim)*(1/den): no (TG,Nr,Nc) logsoftmax temp
    pos = jnp.sum(sim * mask_ref[...][None, :, :], axis=-1)              # (TG, Nr)
    # TODO(synk): pos could be MXU-offloaded as sum_d(z * (mask @ z)); at Nc==Dp==128 it is a
    # wash (same-size elementwise + cross-lane reduce) and adds a non-batched einsum lowering
    # risk, so the proven VPU/XLU form is kept.
    out_ref[...] = lse - pos * invden_ref[...]


def _choose_tg(G, Nr, Nc, Dp):
    budget = 24 << 20                      # conservative vs the 32 MiB scoped default (v7x-safe)
    per_g = (2 * Nc * Dp * 2               # double-buffered bf16 z tile
             + 3 * Nr * Nc * 4             # live f32 (Nr, Nc) temporaries per group
             + 2 * Nr * 4)                 # double-buffered per-anchor output
    resident = Nr * Nc * 8 + Nr * 4        # mask + bias + inv_den
    tg = int(max(1, (budget - resident) // per_g))
    if Nc >= 256:
        tg = min(tg, 8)                    # bound vreg/VMEM pressure at large N
    tg = min(tg, 64, G)
    if G >= 16:                            # >=2 grid steps so the 2nd v7x TC has work
        tg = min(tg, _round_up((G + 1) // 2, 8))
    if tg >= G:
        return G, G                        # single step: block == full dim, always legal
    tg = max(8, (tg // 8) * 8)             # multi-step: out-block sublane dim must be %8
    if tg >= G:
        return G, G
    return tg, _round_up(G, tg)


@jax.jit
def _contrastive_launch(z, mask, bias, invden):
    # z: (G, N, D) bf16; mask/bias: (Nr, Nc) f32; invden: (1, Nr) f32
    G, N, D = z.shape
    Nr, Nc = mask.shape
    Dp = _round_up(D, 128)                 # zero-padded contraction dim (numerically exact)
    TG, G_pad = _choose_tg(G, Nr, Nc, Dp)
    if (G_pad, Nc, Dp) != (G, N, D):
        z = jnp.pad(z, ((0, G_pad - G), (0, Nc - N), (0, Dp - D)))
    per = pl.pallas_call(
        _contrastive_core_kernel,
        grid=(G_pad // TG,),
        in_specs=[
            pl.BlockSpec((TG, Nc, Dp), lambda g: (g, 0, 0)),
            pl.BlockSpec((Nr, Nc), lambda g: (0, 0)),
            pl.BlockSpec((Nr, Nc), lambda g: (0, 0)),
            pl.BlockSpec((1, Nr), lambda g: (0, 0)),
        ],
        out_specs=pl.BlockSpec((TG, Nr), lambda g: (g, 0)),
        out_shape=jax.ShapeDtypeStruct((G_pad, Nr), jnp.float32),
        compiler_params=pltpu.CompilerParams(dimension_semantics=("parallel",)),
    )(z, mask, bias, invden)
    return jnp.mean(per[:G, :N])           # drop padded groups / padded anchors before the mean


# Cached mask / diag-bias / 1-over-den device arrays, keyed by mask signature.
_MASK_CACHE = {}


def _get_mask_arrays(key):
    hit = _MASK_CACHE.get(key)
    if hit is not None:
        return hit
    if key[0] == "temporal":
        _, t, nb = key
        lab = np.tile(np.arange(t), nb)
    else:
        lab = np.asarray(key[1], dtype=np.int64)
    N = int(lab.shape[0])
    eq = (lab[:, None] == lab[None, :]).astype(np.float32)
    np.fill_diagonal(eq, 0.0)                           # = logits_labels of the torch code
    Nr = _round_up(N, 8)                                # anchor rows: sublane-aligned only
    Nc = _round_up(N, 128)                              # candidate cols: lane-dense
    mask = np.zeros((Nr, Nc), np.float32)
    mask[:N, :N] = eq
    bias = np.zeros((Nr, Nc), np.float32)
    bias[np.arange(N), np.arange(N)] = -1e9             # exclude self-similarity from softmax
    bias[:, N:] = -1e9                                  # exclude padded candidates
    den = eq.sum(axis=1)
    inv = np.zeros((1, Nr), np.float32)
    inv[0, :N] = np.divide(1.0, den, out=np.full_like(den, np.inf), where=den > 0)
    arrs = (N, jnp.asarray(mask), jnp.asarray(bias), jnp.asarray(inv))
    _MASK_CACHE[key] = arrs
    return arrs


def contrastive_core(z, mask_key):
    """z: (G, N, D) array (bf16 preferred); mask_key: hashable signature of the positives mask."""
    N, mask, bias, inv = _get_mask_arrays(mask_key)
    assert N == z.shape[1], "mask signature does not match the anchor axis"
    return _contrastive_launch(z.astype(jnp.bfloat16), mask, bias, inv)


# ---------------------------------------------------------------------------
# Loss functions (mirror the torch reference; the Pallas kernel does the heavy math)
# ---------------------------------------------------------------------------
def self_supervised_contrastive_loss(z, nb_trans):
    B = int(z.shape[0] // nb_trans)
    T = z.shape[1]
    if T == 1:
        return jnp.float32(0.0)
    zg = z.reshape(B, T * nb_trans, z.shape[-1])
    return contrastive_core(zg, ("temporal", int(T), int(nb_trans)))


def supervised_contrastive_loss_inter(z, labels_np, nb_trans):
    B = z.shape[0] / nb_trans
    if B == 1:
        return jnp.float32(0.0)
    zg = jnp.transpose(z, (1, 0, 2))                  # (T, nb_trans*B, D)
    key = ("labels", tuple(int(v) for v in np.asarray(labels_np).reshape(-1)))
    return contrastive_core(zg, key)


def supervised_contrastive_loss_intra(z, labels_np, nb_trans):
    B = z.shape[0] / nb_trans
    if B == 1:
        return jnp.float32(0.0)
    labels_list = [int(v) for v in np.asarray(labels_np).reshape(-1)]
    count = Counter(labels_list)
    if len(set(count)) == B:
        return jnp.float32(0.0)
    loss_sum = jnp.float32(0.0)
    i = 0
    for key_lab in count:
        idx = [j for j, v in enumerate(labels_list) if v == key_lab]
        data_key = z[np.asarray(idx)]
        nb_initial = data_key.shape[0] // nb_trans
        if nb_initial == 1:
            loss_sum = loss_sum + 0.0
            i += 1
            break  # reproduce the original early `break`
        zg = jnp.transpose(data_key, (1, 0, 2))       # (T, n_k*nb_trans, D)
        loss_sum = loss_sum + contrastive_core(zg, ("temporal", int(nb_initial), int(nb_trans)))
        i += 1
    return loss_sum / i


def _maxpool1d_time(z):
    # glue: F.max_pool1d(z.transpose(1,2), kernel_size=2).transpose(1,2)
    B, T, D = z.shape
    Tp = T // 2
    return z[:, :2 * Tp].reshape(B, Tp, 2, D).max(axis=2)


def mixed_loss(nb_trans, z, labels_np, alpha=0.34, beta=0.33, temporal_unit=0):
    loss = jnp.float32(0.0)
    intra = jnp.float32(0.0)
    d = 0
    while z.shape[1] > 1:
        if alpha != 0:
            loss = loss + alpha * supervised_contrastive_loss_inter(z, labels_np, nb_trans)
        if beta != 0:
            intra = beta * supervised_contrastive_loss_intra(z, labels_np, nb_trans)
            loss = loss + intra
        if d >= temporal_unit:
            if 1 - alpha - beta != 0:
                loss = loss + (1 - alpha - beta) * self_supervised_contrastive_loss(z, nb_trans)
        d += 1
        z = _maxpool1d_time(z)
    if z.shape[1] == 1:
        if alpha != 0:
            loss = loss + alpha * supervised_contrastive_loss_inter(z, labels_np, nb_trans)
        if beta != 0:
            # NOTE: original torch code does `intra += ...` here (carries previous value)
            intra = intra + beta * supervised_contrastive_loss_intra(z, labels_np, nb_trans)
            loss = loss + intra
        d += 1
    return loss / d


# ---------------------------------------------------------------------------
# Mixed_calculation forward
# ---------------------------------------------------------------------------
def take_per_row(A, indx, num_elem):
    # A: (B, T, C) channels-last; indx: host ints (B,); returns (B, num_elem, C)
    all_indx = np.asarray(indx)[:, None] + np.arange(num_elem)
    return A[jnp.arange(A.shape[0])[:, None], jnp.asarray(all_indx)]


class MixedCalculation:
    def __init__(self, alpha=0.34, beta=0.33, temporal_unit=0):
        self.alpha = alpha
        self.beta = beta
        self.temporal_unit = temporal_unit

    def __call__(self, data, labels, model):
        # data: (B, C, T) channels-first (torch NCL); labels: (B, T) float
        labels_m = jnp.mean(labels, axis=-1, keepdims=True).astype(jnp.int32)  # (B, 1)
        labels_np = np.asarray(labels_m)
        B = data.shape[0]
        ts_l = data.shape[-1]
        temporal_unit = 1
        crop_l = int(np.random.randint(2 ** (temporal_unit + 1), ts_l + 1))
        crop_left = int(np.random.randint(ts_l - crop_l + 1))
        crop_right = crop_left + crop_l
        nu_trans = int(np.random.randint(3, 4))
        crop_eleft_1 = int(np.random.randint(crop_left + 1))
        crop_eright_1 = int(np.random.randint(crop_right, ts_l + 1))
        crop_eleft_2 = int(np.random.randint(crop_eleft_1 + 1))
        crop_eright_2 = int(np.random.randint(crop_eright_1, ts_l + 1))
        crop_offset = np.random.randint(-crop_eleft_2, ts_l - crop_eright_2 + 1, size=B)

        data_t = jnp.transpose(data, (0, 2, 1))  # (B, T, C) channels-last, once

        # model returns channels-last (B, L, D) / (B, L, K) in bf16; no per-crop transposes needed
        out1, class1 = model(take_per_row(data_t, crop_offset + crop_eleft_2,
                                          crop_right - crop_eleft_2))
        out1 = out1[:, -crop_l:]
        class1 = class1[:, -crop_l:, :]

        out2, class2 = model(take_per_row(data_t, crop_offset + crop_eleft_1,
                                          crop_eright_1 - crop_eleft_1))
        out2 = out2[:, crop_left - crop_eleft_1:crop_right - crop_eleft_1]
        class2 = class2[:, crop_left - crop_eleft_1:crop_right - crop_eleft_1, :]

        out3, class3 = model(take_per_row(data_t, crop_offset + crop_left,
                                          crop_eright_2 - crop_left))
        out3 = out3[:, :crop_l]
        class3 = class3[:, :crop_l, :]

        output = jnp.concatenate([out1, out2, out3], axis=0)       # (3B, crop_l, D) bf16
        sup_labels = np.tile(labels_np, (3, 1))                    # (3B, 1)
        loss_h = mixed_loss(nu_trans, output, sup_labels, temporal_unit=temporal_unit)
        labels_out = jnp.asarray(np.tile(labels_np, (3, class1.shape[1])), dtype=jnp.int32)
        # single small transpose back to the torch (3B, K, crop_l) convention
        classification = jnp.transpose(
            jnp.concatenate([class1, class2, class3], axis=0), (0, 2, 1)).astype(jnp.float32)
        return loss_h, output.astype(jnp.float32), classification, labels_out


def make_model(key, c_in, d_repr, n_classes):
    k1, k2, k3, k4 = jax.random.split(key, 4)
    wr = jax.random.normal(k1, (c_in, d_repr), jnp.float32) * 0.3
    br = jax.random.normal(k2, (1, d_repr), jnp.float32) * 0.05
    wc = jax.random.normal(k3, (c_in, n_classes), jnp.float32) * 0.3
    bc = jax.random.normal(k4, (1, n_classes), jnp.float32) * 0.05

    # Fuse the two heads into one unpadded (C, D+K) weight — the encoder is store-bound,
    # so the output stays exactly D+K columns wide (bf16) instead of being 128-padded.
    P = d_repr + n_classes
    w_fused = jnp.concatenate([wr, wc], axis=1).astype(jnp.bfloat16)   # (C, P)
    b_fused = jnp.concatenate([br, bc], axis=1).astype(jnp.float32)    # (1, P)

    def model(x_nlc):
        return encoder_apply(x_nlc, w_fused, b_fused, d_repr, n_classes)

    return model


if __name__ == "__main__":
    np.random.seed(0)                     # deterministic crop sampling (host-side)
    key = jax.random.PRNGKey(0)
    kd, km = jax.random.split(key)

    B, C, T = 4, 4, 8                     # batch, channels, time
    D_REPR, N_CLASSES = 8, 3

    data = jax.random.normal(kd, (B, C, T), jnp.float32)
    # per-timestep labels, constant per sample: classes [0, 0, 1, 1]
    lbl_vals = np.array([0, 0, 1, 1], dtype=np.float32)
    labels = jnp.asarray(np.repeat(lbl_vals[:, None], T, axis=1))  # (B, T)

    model = make_model(km, C, D_REPR, N_CLASSES)
    module = MixedCalculation(alpha=0.34, beta=0.33, temporal_unit=0)

    # TODO(synk): the Counter-driven intra-loss loop and the shape-changing while-loop stay
    # host-driven (data-dependent shapes); each level launches one small cached Pallas call.
    loss_h, output, classification, labels_out = module(data, labels, model)
    jax.block_until_ready((loss_h, output, classification, labels_out))
    print("KERNEL_OK")
</pallas_src>

<mosaic_0001>
module attributes {stable_mosaic.version = 11 : i64} {
  func.func @_encoder_kernel(%arg0: i32, %arg1: memref<16x4xf32, #tpu.memory_space<vmem>>, %arg2: memref<4x11xbf16, #tpu.memory_space<vmem>>, %arg3: memref<1x11xf32, #tpu.memory_space<vmem>>, %arg4: memref<16x11xbf16, #tpu.memory_space<vmem>>) attributes {dimension_semantics = [#tpu.dimension_semantics<parallel>], iteration_bounds = array<i64: 2>, scalar_prefetch = 0 : i64, scratch_operands = 0 : i64, tpu.core_type = #tpu.core_type<tc>, window_params = [{transform_indices = @transform_0, window_bounds = array<i64: 16, 4>}, {pipeline_mode = #tpu.pipeline_mode<synchronous>, transform_indices = @transform_1, window_bounds = array<i64: 4, 11>}, {pipeline_mode = #tpu.pipeline_mode<synchronous>, transform_indices = @transform_2, window_bounds = array<i64: 1, 11>}, {transform_indices = @transform_3, window_bounds = array<i64: 16, 11>}]} {
    %c0 = arith.constant 0 : index
    %c0_0 = arith.constant 0 : index
    %0 = vector.load %arg1[%c0, %c0_0] : memref<16x4xf32, #tpu.memory_space<vmem>>, vector<16x4xf32>
    %1 = arith.truncf %0 : vector<16x4xf32> to vector<16x4xbf16>
    %c0_1 = arith.constant 0 : index
    %c0_2 = arith.constant 0 : index
    %2 = vector.load %arg2[%c0_1, %c0_2] : memref<4x11xbf16, #tpu.memory_space<vmem>>, vector<4x11xbf16>
    %cst = arith.constant dense<0.000000e+00> : vector<16x11xf32>
    %3 = tpu.matmul %1, %2, %cst {dimension_numbers = #tpu.dot_dimension_numbers<[1], [0], [0], [1], [0, 0, 1, 1], [], []>} : vector<16x4xbf16>, vector<4x11xbf16>, vector<16x11xf32> -> vector<16x11xf32>
    %c0_3 = arith.constant 0 : index
    %c0_4 = arith.constant 0 : index
    %4 = vector.load %arg3[%c0_3, %c0_4] : memref<1x11xf32, #tpu.memory_space<vmem>>, vector<1x11xf32>
    %5 = vector.broadcast %4 : vector<1x11xf32> to vector<16x11xf32>
    %6 = arith.addf %3, %5 : vector<16x11xf32>
    %7 = arith.truncf %6 : vector<16x11xf32> to vector<16x11xbf16>
    %c0_5 = arith.constant 0 : index
    %c0_6 = arith.constant 0 : index
    %8 = vector.load %arg4[%c0_5, %c0_6] : memref<16x11xbf16, #tpu.memory_space<vmem>>, vector<16x11xbf16>
    tpu.vector_store %arg4[%c0_5, %c0_6], %7 {strides = array<i32>} : memref<16x11xbf16, #tpu.memory_space<vmem>>, vector<16x11xbf16>,
    return
  }
  func.func @transform_0(%arg0: i32) -> (i32, i32) {
    %c0_i32 = arith.constant 0 : i32
    %c0_i32_0 = arith.constant 0 : i32
    return %arg0, %c0_i32 : i32, i32
  }
  func.func @transform_1(%arg0: i32) -> (i32, i32) {
    %c0_i32 = arith.constant 0 : i32
    %c0_i32_0 = arith.constant 0 : i32
    %c0_i32_1 = arith.constant 0 : i32
    return %c0_i32, %c0_i32_0 : i32, i32
  }
  func.func @transform_2(%arg0: i32) -> (i32, i32) {
    %c0_i32 = arith.constant 0 : i32
    %c0_i32_0 = arith.constant 0 : i32
    %c0_i32_1 = arith.constant 0 : i32
    return %c0_i32, %c0_i32_0 : i32, i32
  }
  func.func @transform_3(%arg0: i32) -> (i32, i32) {
    %c0_i32 = arith.constant 0 : i32
    %c0_i32_0 = arith.constant 0 : i32
    return %arg0, %c0_i32 : i32, i32
  }
}

</mosaic_0001>

<llo_original>
// kernel: _encoder_launch.1
$region0: #{_encoder_launch.1}
  #allocation0 [shape = 'u32[]', space=smem, size = 0x4, offset = 0x4, fixed_abs, tag = 'smem constant byte address 0x4 - core index']
  #allocation1 [shape = 'u32[144,128]{1,0:T(1,128)}', space=vmem, size = 0x12000, scoped, tag = 'internal scratch']
  %s0 = inlined_call_operand.vmem [shape: f32[32,4], index: 0, kind: input, shape index: {}]
  %s1 = inlined_call_operand.vmem [shape: bf16[4,11], index: 1, kind: input, shape index: {}]
  %s2 = inlined_call_operand.vmem [shape: f32[1,11], index: 2, kind: input, shape index: {}]
  %s3 = inlined_call_operand.vmem [shape: bf16[32,11], index: 3, kind: output, shape index: {}]
  %s4 = sld [smem:[#allocation0]]
  $region45: #{_encoder_launch.1} parent=0
    _
  %s6 = ssub.s32 1, %s4
  %s7 = scalar_select 0, %s6, %s4
  loop: start=0, step=1, limit=4
  $region2: #{_encoder_launch.1} parent=0 // loop_pre_header
    _
  $region3: #{_encoder_launch.1} parent=0 // loop_header
    %s9 = sphi 0, %s13
    %p10 = scmp.ge.s32.totalorder %s9, 4
    %s19 = sphi 0, %s21
    %s22 = sphi 0, %s19
    %s23 = sphi 0, %s22
    %s39 = sphi 0, %s23
    %s43 = sphi 0, %s43
    %s45 = sphi 0, %s43
    %s46 = sphi 0, %s45
    %s60 = sphi 0, %s46
    %s64 = sphi 0, %s64
    %s66 = sphi 0, %s64
    %s67 = sphi 0, %s66
    %s81 = sphi 0, %s67
    %s87 = sphi 0, %s89
    %s90 = sphi 0, %s87
    %s91 = sphi 0, %s90
    %s107 = sphi 0, %s91
  $region4: #{_encoder_launch.1} parent=0 // loop_header_branch
    %12 = sbr.rel (%p10) target = $region8
  $region5: #{_encoder_launch.1} parent=0 // loop_body
    %s14 = ssub.s32 %s9, 1
    %s15 = ssub.s32 %s9, 2
    %s16 = sadd.s32 %s9, 1
    %s17 = ssub.s32 %s9, %s16
    %p18 = scmp.eq.s32.totalorder %s17, 0
    %s20 = sadd.s32 %s19, 1
    %s21 = scalar_select %p18, %s19, %s20
    %p24 = pneg %p18
    %p25 = scmp.eq.s32.totalorder %s9, 1
    %p26 = por %p24, %p25
    %p27 = scmp.ne.s32.totalorder %s19, %s22
    %p28 = scmp.eq.s32.totalorder %s9, 0
    %p29 = por %p27, %p28
    %p30 = scmp.ne.s32.totalorder %s19, %s22
    %p31 = scmp.eq.s32.totalorder %s14, 1
    %p32 = por %p30, %p31
    %p33 = scmp.ne.s32.totalorder %s22, %s23
    %p34 = scmp.eq.s32.totalorder %s14, 0
    %p35 = por %p33, %p34
    %p36 = scmp.ne.s32.totalorder %s22, %s23
    %p37 = scmp.eq.s32.totalorder %s15, 1
    %p38 = por %p36, %p37
    %p40 = scmp.ne.s32.totalorder %s23, %s39
    %p41 = scmp.eq.s32.totalorder %s15, 0
    %p42 = por %p40, %p41
    %s44 = sadd.s32 %s43, 1
    %p47 = scmp.eq.s32.totalorder %s9, 1
    %p48 = scmp.ne.s32.totalorder %s43, %s45
    %p49 = scmp.eq.s32.totalorder %s9, 0
    %p50 = por %p48, %p49
    %p51 = scmp.ne.s32.totalorder %s43, %s45
    %p52 = scmp.eq.s32.totalorder %s14, 1
    %p53 = por %p51, %p52
    %p54 = scmp.ne.s32.totalorder %s45, %s46
    %p55 = scmp.eq.s32.totalorder %s14, 0
    %p56 = por %p54, %p55
    %p57 = scmp.ne.s32.totalorder %s45, %s46
    %p58 = scmp.eq.s32.totalorder %s15, 1
    %p59 = por %p57, %p58
    %p61 = scmp.ne.s32.totalorder %s46, %s60
    %p62 = scmp.eq.s32.totalorder %s15, 0
    %p63 = por %p61, %p62
    %s65 = sadd.s32 %s64, 1
    %p68 = scmp.eq.s32.totalorder %s9, 1
    %p69 = scmp.ne.s32.totalorder %s64, %s66
    %p70 = scmp.eq.s32.totalorder %s9, 0
    %p71 = por %p69, %p70
    %p72 = scmp.ne.s32.totalorder %s64, %s66
    %p73 = scmp.eq.s32.totalorder %s14, 1
    %p74 = por %p72, %p73
    %p75 = scmp.ne.s32.totalorder %s66, %s67
    %p76 = scmp.eq.s32.totalorder %s14, 0
    %p77 = por %p75, %p76
    %p78 = scmp.ne.s32.totalorder %s66, %s67
    %p79 = scmp.eq.s32.totalorder %s15, 1
    %p80 = por %p78, %p79
    %p82 = scmp.ne.s32.totalorder %s67, %s81
    %p83 = scmp.eq.s32.totalorder %s15, 0
    %p84 = por %p82, %p83
    %s85 = ssub.s32 %s9, %s16
    %p86 = scmp.eq.s32.totalorder %s85, 0
    %s88 = sadd.s32 %s87, 1
    %s89 = scalar_select %p86, %s87, %s88
    %p92 = pneg %p86
    %p93 = scmp.eq.s32.totalorder %s9, 1
    %p94 = por %p92, %p93
    %p95 = scmp.ne.s32.totalorder %s87, %s90
    %p96 = scmp.eq.s32.totalorder %s9, 0
    %p97 = por %p95, %p96
    %p98 = scmp.ne.s32.totalorder %s87, %s90
    %p99 = scmp.eq.s32.totalorder %s14, 1
    %p100 = por %p98, %p99
    %p101 = scmp.ne.s32.totalorder %s90, %s91
    %p102 = scmp.eq.s32.totalorder %s14, 0
    %p103 = por %p101, %p102
    %p104 = scmp.ne.s32.totalorder %s90, %s91
    %p105 = scmp.eq.s32.totalorder %s15, 1
    %p106 = por %p104, %p105
    %p108 = scmp.ne.s32.totalorder %s91, %s107
    %p109 = scmp.eq.s32.totalorder %s15, 0
    %p110 = por %p108, %p109
    %p111 = scmp.le.s32.totalorder 1, %s9
    %p112 = scmp.lt.s32.totalorder %s9, 3
    %p113 = pnand %p111, %p112
    %p114 = pneg %p113
    // Predicated region
    $region9: #{_encoder_launch.1} parent=5 // pred_check
      _
    $region10: #{_encoder_launch.1} parent=5 // pred_check_branch
      %116 = sbr.rel (%p113) target = $region12
    $region11: #{_encoder_launch.1} parent=5 // pred_region
      %s117 = ssub.s32 %s9, 1
      // Predicated region
      $region13: #{_encoder_launch.1} parent=11 // pred_check
        %p118 = pneg %p56
      $region14: #{_encoder_launch.1} parent=11 // pred_check_branch
        %120 = sbr.rel (%p118) target = $region16
      $region15: #{_encoder_launch.1} parent=11 // pred_region
        _
      $region16: #{_encoder_launch.1} parent=11 // pred_fallthru
        _
      // Predicated region
      $region17: #{_encoder_launch.1} parent=11 // pred_check
        %p121 = pneg %p77
      $region18: #{_encoder_launch.1} parent=11 // pred_check_branch
        %123 = sbr.rel (%p121) target = $region20
      $region19: #{_encoder_launch.1} parent=11 // pred_region
        _
      $region20: #{_encoder_launch.1} parent=11 // pred_fallthru
        _
    $region12: #{_encoder_launch.1} parent=5 // pred_fallthru
      _
    %p124 = scmp.lt.s32.totalorder %s9, 2
    // Predicated region
    $region21: #{_encoder_launch.1} parent=5 // pred_check
      %p125 = pneg %p124
    $region22: #{_encoder_launch.1} parent=5 // pred_check_branch
      %127 = sbr.rel (%p125) target = $region24
    $region23: #{_encoder_launch.1} parent=5 // pred_region
      // Predicated region
      $region25: #{_encoder_launch.1} parent=23 // pred_check
        %p128 = pneg %p29
      $region26: #{_encoder_launch.1} parent=23 // pred_check_branch
        %130 = sbr.rel (%p128) target = $region28
      $region27: #{_encoder_launch.1} parent=23 // pred_region
        %s131 = smul.u32 2, %s9
        %p132 = scmp.lt.s32.totalorder %s131, 3
        %s133 = scalar_select %p132, %s131, 3
        %s134 = smul.addr %s133, 8
        %s135 = scalar_lea.vmem %s0, %s134
        %s136 = smul.u32 2, %s9
      $region28: #{_encoder_launch.1} parent=23 // pred_fallthru
        _
    $region24: #{_encoder_launch.1} parent=5 // pred_fallthru
      _
    %p137 = scmp.le.s32.totalorder 1, %s9
    %p138 = scmp.lt.s32.totalorder %s9, 3
    %p139 = pnand %p137, %p138
    %p140 = pneg %p139
    // Predicated region
    $region29: #{_encoder_launch.1} parent=5 // pred_check
      _
    $region30: #{_encoder_launch.1} parent=5 // pred_check_branch
      %142 = sbr.rel (%p139) target = $region32
    $region31: #{_encoder_launch.1} parent=5 // pred_region
      %s143 = ssub.s32 %s9, 1
      %s144 = smul.u32 2, %s14
      %p145 = scmp.lt.s32.totalorder %s144, 3
      %s146 = scalar_select %p145, %s144, 3
      %s147 = smul.addr %s146, 8
      %s148 = scalar_lea.vmem %s0, %s147
      %p149 = pneg %p35
      %p150 = pneg %p32
      %p151 = pneg %p56
      %p152 = pneg %p53
      %p153 = pneg %p77
      %p154 = pneg %p74
      %p155 = pneg %p103
      %p156 = pneg %p100
      %s157 = smul.u32 2, %s14
      %p158 = scmp.lt.s32.totalorder %s157, 3
      %s159 = scalar_select %p158, %s157, 3
      %s160 = smul.addr %s159, 4
      %s161 = scalar_lea.vmem %s3, %s160
      %s162 = smul.u32 2, %s14
      %p163 = scmp.lt.s32.totalorder %s162, 3
      %s164 = scalar_select %p163, %s162, 3
      %s165 = smul.addr %s164, 8
      %s166 = scalar_lea.vmem %s0, %s165
      %s167 = smul.u32 2, %s14
      %s168 = smul.u32 2, %s14
      %p169 = scmp.lt.s32.totalorder %s168, 3
      %s170 = scalar_select %p169, %s168, 3
      %s171 = smul.addr %s170, 4
      %s172 = scalar_lea.vmem %s3, %s171
      %s173 = smul.u32 2, %s14
      %v175 = vld [vmem:[%s166] sm:$0xff]
      %v176 = vld [vmem:[%s166 + $0x8] sm:$0xff]
      %v177 = vpack.c.bf16 %v176, %v175
      %v178 = vld [vmem:[%s1] sm:$0x3]
      %v179 = vld [vmem:[%s2] sm:$0x1]
      %v181 = vlaneseq
      %v182 = vshrl.u32 %v181, 7
      %v183 = vsub.s32 0, %v182
      %v184 = vrot.slane %v179, %v183
      %vm186 = vcmask 31744
      %v188 = vsel %vm186, %v177, 0
      %vm190 = vcmask 1041408
      %v192 = vsel %vm190, %v178, 0
      %194 = vmatprep.subr.bf16.mxu0 0
      %195 = vmatpush1.bf16.msra.mxu0 %v192
      %196 = vmatprep.subr.bf16.mxu0 0
      %197 = vmatpush1.bf16.msra.mxu0 0
      %198 = vmatprep.subr.bf16.mxu0 0
      %199 = vmatpush1.bf16.msra.mxu0 0
      %200 = vmatprep.subr.bf16.mxu0 0
      %201 = vmatpush1.bf16.msra.mxu0 0
      %202 = vmatprep.subr.bf16.mxu0 0
      %203 = vmatpush1.bf16.msra.mxu0 0
      %204 = vmatprep.subr.bf16.mxu0 0
      %205 = vmatpush1.bf16.msra.mxu0 0
      %206 = vmatprep.subr.bf16.mxu0 0
      %207 = vmatpush1.bf16.msra.mxu0 0
      %208 = vmatprep.subr.bf16.mxu0 0
      %209 = vmatpush1.bf16.msra.mxu0 0
      %210 = vmatprep.subr.bf16.mxu0 0
      %211 = vmatpush1.bf16.msra.mxu0 0
      %212 = vmatprep.subr.bf16.mxu0 0
      %213 = vmatpush1.bf16.msra.mxu0 0
      %214 = vmatprep.subr.bf16.mxu0 0
      %215 = vmatpush1.bf16.msra.mxu0 0
      %216 = vmatprep.subr.bf16.mxu0 0
      %217 = vmatpush1.bf16.msra.mxu0 0
      %218 = vmatprep.subr.bf16.mxu0 0
      %219 = vmatpush1.bf16.msra.mxu0 0
      %220 = vmatprep.subr.bf16.mxu0 0
      %221 = vmatpush1.bf16.msra.mxu0 0
      %222 = vmatprep.subr.bf16.mxu0 0
      %223 = vmatpush1.bf16.msra.mxu0 0
      %224 = vmatprep.subr.bf16.mxu0 0
      %225 = vmatpush1.bf16.msra.mxu0 0
      %226 = vmatprep.mubr.bf16.mxu0 0
      %227 = vmatmul.mubr.bf16.gmra.mrb[0].mxu0 %v188
      %v228 = vpop.f32.mrb[0].mxu0
      %v229 = vadd.f32 %v184, %v228
      %v230 = vpop.f32.mrb[0].mxu0
      %v231 = vpop.f32.mrb[0].mxu0
      %v232 = vadd.f32 %v184, %v231
      %v233 = vpop.f32.mrb[0].mxu0
      %234 = vdwg.mxu0
      %v235 = vpack.c.bf16 %v232, %v229
      %v237 = vunpack.c.l.b16 %v235
      %v238 = vunpack.c.h.b16 %v235
      %v239 = vpack.c.b16 %v237, %v237
      %v240 = vpack.c.b16 %v238, %v238
      %vm243 = vcmask 84992
      %244 = vst.msk [vmem:[%s172] sm:$0xf] %vm243, %v239
      %245 = vst.msk [vmem:[%s172 + $0x4] sm:$0xf] %vm243, %v240
      %s246 = smul.u32 2, %s14
      %p247 = scmp.lt.s32.totalorder %s246, 3
      %s248 = scalar_select %p247, %s246, 3
      %s249 = smul.addr %s248, 4
      %s250 = scalar_lea.vmem %s3, %s249
      // Predicated region
      $region33: #{_encoder_launch.1} parent=31 // pred_check
        %p251 = pneg %p100
      $region34: #{_encoder_launch.1} parent=31 // pred_check_branch
        %253 = sbr.rel (%p251) target = $region36
      $region35: #{_encoder_launch.1} parent=31 // pred_region
        %s254 = smul.u32 2, %s14
      $region36: #{_encoder_launch.1} parent=31 // pred_fallthru
        _
    $region32: #{_encoder_launch.1} parent=5 // pred_fallthru
      _
    %p255 = scmp.le.s32.totalorder 2, %s9
    // Predicated region
    $region37: #{_encoder_launch.1} parent=5 // pred_check
      %p256 = pneg %p255
    $region38: #{_encoder_launch.1} parent=5 // pred_check_branch
      %258 = sbr.rel (%p256) target = $region40
    $region39: #{_encoder_launch.1} parent=5 // pred_region
      %s259 = ssub.s32 %s9, 2
      // Predicated region
      $region41: #{_encoder_launch.1} parent=39 // pred_check
        %p260 = pneg %p106
      $region42: #{_encoder_launch.1} parent=39 // pred_check_branch
        %262 = sbr.rel (%p260) target = $region44
      $region43: #{_encoder_launch.1} parent=39 // pred_region
        %s263 = smul.u32 2, %s15
        %p264 = scmp.lt.s32.totalorder %s263, 3
        %s265 = scalar_select %p264, %s263, 3
        %s266 = smul.addr %s265, 4
        %s267 = scalar_lea.vmem %s3, %s266
      $region44: #{_encoder_launch.1} parent=39 // pred_fallthru
        _
    $region40: #{_encoder_launch.1} parent=5 // pred_fallthru
      _
  $region6: #{_encoder_launch.1} parent=0 // loop_footer
    %s13 = sadd.s32 1, %s9
  $region7: #{_encoder_launch.1} parent=0 // loop_footer_branch
    %8 = sbr.rel target = $region3
  $region8: #{_encoder_launch.1} parent=0 // loop_exit
    _

</llo_original>
